<compile_context>
chip_gen: v5e
topology: v5e:2x2
jax: 0.10.0
libtpu: 0.0.40
codegen_flags: <defaults>
</compile_context>

<pallas_src>
import jax
import jax.numpy as jnp
from jax.experimental import pallas as pl
from jax.experimental.pallas import tpu as pltpu

EMB_DIM = 32              # args.emb_dim (small synthetic value)
HIDDEN = 512              # fixed in the module
N_CLASSES_CONTINENT = 6   # args.n_classes_continent


def _round_up(x, m):
    return ((x + m - 1) // m) * m


def _mlp_head_kernel(x_ref, w1_ref, b1_ref, w2_ref, b2_ref, o_ref):
    # In-kernel bf16 cast of the activation tile — avoids a separate wrapper-side
    # astype/pad pass over x in HBM.
    x = x_ref[...].astype(jnp.bfloat16)
    # First linear (bf16 x bf16 -> f32 accumulation on the MXU) + bias + ReLU.
    h = jnp.dot(x, w1_ref[...], preferred_element_type=jnp.float32)
    h = jnp.maximum(h + b1_ref[...], 0.0)          # b1 is (1, H), broadcasts over rows
    # Dropout: identity (eval mode).
    out = jnp.dot(h.astype(jnp.bfloat16), w2_ref[...],
                  preferred_element_type=jnp.float32)
    # bf16 store halves the dominant padded-output writeback stream
    # (store stays dense: 128 lanes).
    o_ref[...] = (out + b2_ref[...]).astype(o_ref.dtype)


def classify_continent_forward(x, w1, b1, w2, b2, *, block_b=4096):
    """x: [B, emb_dim] f32; w1: [emb_dim, 512]; b1: [512]; w2: [512, tags]; b2: [tags].

    Weights are stored [in_features, out_features] (transpose of PyTorch nn.Linear).
    Returns f32 logits [B, tags].
    """
    B, E = x.shape
    H = w1.shape[1]
    T = w2.shape[1]

    # Lane-pad the classifier dimension so the output store is a dense 128-lane vst.
    T_pad = _round_up(T, 128)

    # Batch tile: multiple of 8 sublanes, large (default 4096 rows) to amortize
    # per-grid-step overhead. Pallas masks the partial last block, so no
    # wrapper-side pad/copy of x is needed.
    TB = min(block_b, _round_up(B, 8))
    # v7x megacore: a "parallel" grid axis only shards across the 2 TensorCores
    # if there are >= 2 steps; split large single-step batches in two.
    if B >= 1024 and pl.cdiv(B, TB) < 2:
        TB = _round_up(pl.cdiv(B, 2), 8)
    grid = (pl.cdiv(B, TB),)

    # Weights/biases: bf16 weights (f32 accumulation in-kernel), classifier dim padded.
    w1_b = w1.astype(jnp.bfloat16)
    w2_p = jnp.pad(w2, ((0, 0), (0, T_pad - T))).astype(jnp.bfloat16)
    b1_2d = b1.reshape(1, H).astype(jnp.float32)
    b2_2d = jnp.pad(b2.reshape(1, T), ((0, 0), (0, T_pad - T))).astype(jnp.float32)

    cost = pl.CostEstimate(
        flops=2 * B * E * H + 2 * B * H * T_pad,
        transcendentals=0,
        bytes_accessed=(x.size * 4            # x read as f32
                        + w1_b.size * 2 + w2_p.size * 2
                        + b1_2d.size * 4 + b2_2d.size * 4
                        + B * T_pad * 2),     # bf16 output writeback
    )

    out = pl.pallas_call(
        _mlp_head_kernel,
        out_shape=jax.ShapeDtypeStruct((B, T_pad), jnp.bfloat16),
        grid_spec=pltpu.PrefetchScalarGridSpec(
            num_scalar_prefetch=0,
            grid=grid,
            in_specs=[
                pl.BlockSpec((TB, E), lambda i: (i, 0)),       # x tile (pipelined, f32)
                pl.BlockSpec((E, H), lambda i: (0, 0)),        # W1 (VMEM-resident)
                pl.BlockSpec((1, H), lambda i: (0, 0)),        # b1 (VMEM-resident)
                pl.BlockSpec((H, T_pad), lambda i: (0, 0)),    # W2 (VMEM-resident)
                pl.BlockSpec((1, T_pad), lambda i: (0, 0)),    # b2 (VMEM-resident)
            ],
            out_specs=pl.BlockSpec((TB, T_pad), lambda i: (i, 0)),
        ),
        compiler_params=pltpu.CompilerParams(
            dimension_semantics=("parallel",),
            # TB=4096 peaks at ~18 MiB (h f32 + bf16 copies + double-buffered
            # x/out blocks): above v5e's 16 MiB default scoped limit. 48 MiB is
            # safe on v5e/v6e (128 MiB physical) and v7x (64 MiB physical).
            vmem_limit_bytes=48 * 1024 * 1024,
        ),
        cost_estimate=cost,
    )(x, w1_b, b1_2d, w2_p, b2_2d)

    # Drop lane padding; upcast the (tiny) valid slice back to f32 logits.
    return out[:, :T].astype(jnp.float32)


def _reference(x, w1, b1, w2, b2):
    # Matches kernel numerics: bf16 operands, f32 accumulation, bf16 final store.
    h = jnp.dot(x.astype(jnp.bfloat16), w1.astype(jnp.bfloat16),
                preferred_element_type=jnp.float32) + b1
    h = jnp.maximum(h, 0.0)
    out = jnp.dot(h.astype(jnp.bfloat16), w2.astype(jnp.bfloat16),
                  preferred_element_type=jnp.float32) + b2
    return out.astype(jnp.bfloat16).astype(jnp.float32)


if __name__ == "__main__":
    key = jax.random.PRNGKey(0)
    k_x, k_w1, k_b1, k_w2, k_b2 = jax.random.split(key, 5)

    batch = 2
    x = jax.random.normal(k_x, (batch, EMB_DIM), dtype=jnp.float32)

    # Deterministic parameter init (PyTorch Linear stores [out, in]; we keep [in, out]).
    w1 = jax.random.normal(k_w1, (EMB_DIM, HIDDEN), dtype=jnp.float32) * 0.05
    b1 = jax.random.normal(k_b1, (HIDDEN,), dtype=jnp.float32) * 0.01
    w2 = jax.random.normal(k_w2, (HIDDEN, N_CLASSES_CONTINENT), dtype=jnp.float32) * 0.05
    b2 = jax.random.normal(k_b2, (N_CLASSES_CONTINENT,), dtype=jnp.float32) * 0.01

    out = classify_continent_forward(x, w1, b1, w2, b2)
    out = jax.block_until_ready(out)

    ref = _reference(x, w1, b1, w2, b2)
    assert out.shape == (batch, N_CLASSES_CONTINENT)
    assert jnp.allclose(out, ref, atol=1e-2, rtol=1e-2), "mismatch vs reference"

    print("KERNEL_OK")
</pallas_src>

<mosaic_0001>
module attributes {stable_mosaic.version = 11 : i64} {
  func.func @_mlp_head_kernel(%arg0: i32, %arg1: memref<8x32xf32, #tpu.memory_space<vmem>>, %arg2: memref<32x512xbf16, #tpu.memory_space<vmem>>, %arg3: memref<1x512xf32, #tpu.memory_space<vmem>>, %arg4: memref<512x128xbf16, #tpu.memory_space<vmem>>, %arg5: memref<1x128xf32, #tpu.memory_space<vmem>>, %arg6: memref<8x128xbf16, #tpu.memory_space<vmem>>) attributes {dimension_semantics = [#tpu.dimension_semantics<parallel>], iteration_bounds = array<i64: 1>, scalar_prefetch = 0 : i64, scratch_operands = 0 : i64, tpu.core_type = #tpu.core_type<tc>, window_params = [{transform_indices = @transform_0, window_bounds = array<i64: 8, 32>}, {pipeline_mode = #tpu.pipeline_mode<synchronous>, transform_indices = @transform_1, window_bounds = array<i64: 32, 512>}, {pipeline_mode = #tpu.pipeline_mode<synchronous>, transform_indices = @transform_2, window_bounds = array<i64: 1, 512>}, {pipeline_mode = #tpu.pipeline_mode<synchronous>, transform_indices = @transform_3, window_bounds = array<i64: 512, 128>}, {pipeline_mode = #tpu.pipeline_mode<synchronous>, transform_indices = @transform_4, window_bounds = array<i64: 1, 128>}, {transform_indices = @transform_5, window_bounds = array<i64: 8, 128>}]} {
    %c0 = arith.constant 0 : index
    %c0_0 = arith.constant 0 : index
    %0 = vector.load %arg1[%c0, %c0_0] : memref<8x32xf32, #tpu.memory_space<vmem>>, vector<8x32xf32>
    %1 = arith.truncf %0 : vector<8x32xf32> to vector<8x32xbf16>
    %c0_1 = arith.constant 0 : index
    %c0_2 = arith.constant 0 : index
    %2 = vector.load %arg2[%c0_1, %c0_2] : memref<32x512xbf16, #tpu.memory_space<vmem>>, vector<32x512xbf16>
    %cst = arith.constant dense<0.000000e+00> : vector<8x512xf32>
    %3 = tpu.matmul %1, %2, %cst {dimension_numbers = #tpu.dot_dimension_numbers<[1], [0], [0], [1], [0, 0, 1, 1], [], []>} : vector<8x32xbf16>, vector<32x512xbf16>, vector<8x512xf32> -> vector<8x512xf32>
    %c0_3 = arith.constant 0 : index
    %c0_4 = arith.constant 0 : index
    %4 = vector.load %arg3[%c0_3, %c0_4] : memref<1x512xf32, #tpu.memory_space<vmem>>, vector<1x512xf32>
    %5 = vector.broadcast %4 : vector<1x512xf32> to vector<8x512xf32>
    %6 = arith.addf %3, %5 : vector<8x512xf32>
    %cst_5 = arith.constant 0.000000e+00 : f32
    %7 = vector.broadcast %cst_5 : f32 to vector<8x512xf32>
    %8 = arith.maximumf %6, %7 : vector<8x512xf32>
    %9 = arith.truncf %8 : vector<8x512xf32> to vector<8x512xbf16>
    %c0_6 = arith.constant 0 : index
    %c0_7 = arith.constant 0 : index
    %10 = vector.load %arg4[%c0_6, %c0_7] : memref<512x128xbf16, #tpu.memory_space<vmem>>, vector<512x128xbf16>
    %cst_8 = arith.constant dense<0.000000e+00> : vector<8x128xf32>
    %11 = tpu.matmul %9, %10, %cst_8 {dimension_numbers = #tpu.dot_dimension_numbers<[1], [0], [0], [1], [0, 0, 1, 1], [], []>} : vector<8x512xbf16>, vector<512x128xbf16>, vector<8x128xf32> -> vector<8x128xf32>
    %c0_9 = arith.constant 0 : index
    %c0_10 = arith.constant 0 : index
    %12 = vector.load %arg5[%c0_9, %c0_10] : memref<1x128xf32, #tpu.memory_space<vmem>>, vector<1x128xf32>
    %13 = vector.broadcast %12 : vector<1x128xf32> to vector<8x128xf32>
    %14 = arith.addf %11, %13 : vector<8x128xf32>
    %15 = arith.truncf %14 : vector<8x128xf32> to vector<8x128xbf16>
    %c0_11 = arith.constant 0 : index
    %c0_12 = arith.constant 0 : index
    %16 = vector.load %arg6[%c0_11, %c0_12] : memref<8x128xbf16, #tpu.memory_space<vmem>>, vector<8x128xbf16>
    tpu.vector_store %arg6[%c0_11, %c0_12], %15 {strides = array<i32>} : memref<8x128xbf16, #tpu.memory_space<vmem>>, vector<8x128xbf16>,
    return
  }
  func.func @transform_0(%arg0: i32) -> (i32, i32) {
    %c0_i32 = arith.constant 0 : i32
    %c0_i32_0 = arith.constant 0 : i32
    return %arg0, %c0_i32 : i32, i32
  }
  func.func @transform_1(%arg0: i32) -> (i32, i32) {
    %c0_i32 = arith.constant 0 : i32
    %c0_i32_0 = arith.constant 0 : i32
    %c0_i32_1 = arith.constant 0 : i32
    return %c0_i32, %c0_i32_0 : i32, i32
  }
  func.func @transform_2(%arg0: i32) -> (i32, i32) {
    %c0_i32 = arith.constant 0 : i32
    %c0_i32_0 = arith.constant 0 : i32
    %c0_i32_1 = arith.constant 0 : i32
    return %c0_i32, %c0_i32_0 : i32, i32
  }
  func.func @transform_3(%arg0: i32) -> (i32, i32) {
    %c0_i32 = arith.constant 0 : i32
    %c0_i32_0 = arith.constant 0 : i32
    %c0_i32_1 = arith.constant 0 : i32
    return %c0_i32, %c0_i32_0 : i32, i32
  }
  func.func @transform_4(%arg0: i32) -> (i32, i32) {
    %c0_i32 = arith.constant 0 : i32
    %c0_i32_0 = arith.constant 0 : i32
    %c0_i32_1 = arith.constant 0 : i32
    return %c0_i32, %c0_i32_0 : i32, i32
  }
  func.func @transform_5(%arg0: i32) -> (i32, i32) {
    %c0_i32 = arith.constant 0 : i32
    %c0_i32_0 = arith.constant 0 : i32
    return %arg0, %c0_i32 : i32, i32
  }
}

</mosaic_0001>

<llo_original>
// kernel: tpu_custom_call.1
$region0: #{tpu_custom_call.1}
  #allocation0 [shape = 'u32[]', space=smem, size = 0x4, offset = 0x4, fixed_abs, tag = 'smem constant byte address 0x4 - core index']
  #allocation1 [shape = 'u32[72,128]{1,0:T(1,128)}', space=vmem, size = 0x9000, scoped, tag = 'internal scratch']
  %s0 = inlined_call_operand.hbm [shape: f32[2,32], index: 0, kind: input, shape index: {}]
  %s1 = inlined_call_operand.hbm [shape: bf16[32,512], index: 1, kind: input, shape index: {}]
  %s2 = inlined_call_operand.hbm [shape: f32[1,512], index: 2, kind: input, shape index: {}]
  %s3 = inlined_call_operand.hbm [shape: bf16[512,128], index: 3, kind: input, shape index: {}]
  %s4 = inlined_call_operand.vmem [shape: f32[1,128], index: 4, kind: input, shape index: {}]
  %s5 = inlined_call_operand.hbm [shape: bf16[2,128], index: 5, kind: output, shape index: {}]
  %s6 = sld [smem:[#allocation0]]
  $region46: #{tpu_custom_call.1} parent=0
    _
  %s8 = ssub.s32 1, %s6
  %s9 = scalar_select 0, %s8, %s6
  $region1: #{tpu_custom_call.1} parent=0
    #allocation2 [shape = 'u8[4096]{0}', space=vmem, size = 0x1000, scoped, tag = 'input window, operand 0, single buffered']
    #allocation3 [shape = 's32[1]{0}', space=sflag, size = 0x4, scoped, tag = 'scoped memory for tpu_custom_call.1']
    #allocation4 [shape = 's32[1]{0}', space=sflag, size = 0x4, scoped, tag = 'scoped memory for tpu_custom_call.1']
    #allocation5 [shape = 'u8[32768]{0}', space=vmem, size = 0x8000, scoped, tag = 'input window, operand 1, single buffered']
    #allocation6 [shape = 's32[1]{0}', space=sflag, size = 0x4, scoped, tag = 'scoped memory for tpu_custom_call.1']
    #allocation7 [shape = 'u8[2048]{0}', space=vmem, size = 0x800, scoped, tag = 'input window, operand 2, single buffered']
    #allocation8 [shape = 'u8[131072]{0}', space=vmem, size = 0x20000, scoped, tag = 'input window, operand 3, single buffered']
    #allocation9 [shape = 's32[1]{0}', space=sflag, size = 0x4, scoped, tag = 'scoped memory for tpu_custom_call.1']
    #allocation10 [shape = 'u8[2048]{0}', space=vmem, size = 0x800, scoped, tag = 'output window, operand 0, single buffered']
    %10 = vsyncpa [#allocation3], 0
    %11 = vsyncpa [#allocation6], 0
    %12 = vsyncpa [#allocation9], 0
    %13 = vsyncpa [#allocation4], 0
    // Predicated region
    $region2: #{tpu_custom_call.1} parent=1 // pred_check
      _
    $region3: #{tpu_custom_call.1} parent=1 // pred_check_branch
      %15 = sbr.rel (0) target = $region5
    $region4: #{tpu_custom_call.1} parent=1 // pred_region
      %17 = vsyncadd [#allocation3], 96
      %s18 = sshll.u32 %s0, 4
      %s19 = int_to_ptr.hbm [resolvable:$true] %s18
      %s20 = sshll.u32 [#allocation2], 4
      %s21 = int_to_ptr.vmem [resolvable:$true] %s20
      %26 = dma.hbm_to_vmem [thread:$0]  %s19, 32, %s21, [#allocation3], 32, 32, 2
    $region5: #{tpu_custom_call.1} parent=1 // pred_fallthru
      _
    // Predicated region
    $region6: #{tpu_custom_call.1} parent=1 // pred_check
      _
    $region7: #{tpu_custom_call.1} parent=1 // pred_check_branch
      %28 = sbr.rel (0) target = $region9
    $region8: #{tpu_custom_call.1} parent=1 // pred_region
      %30 = vsyncadd [#allocation6], 0
      %s31 = sshll.u32 %s1, 4
      %s32 = int_to_ptr.hbm [resolvable:$true] %s31
      %s33 = sshll.u32 [#allocation5], 4
      %s34 = int_to_ptr.vmem [resolvable:$true] %s33
      %39 = dma.hbm_to_vmem [thread:$0]  %s32, 1024, %s34, [#allocation6], 256, 256, 16
    $region9: #{tpu_custom_call.1} parent=1 // pred_fallthru
      _
    // Predicated region
    $region10: #{tpu_custom_call.1} parent=1 // pred_check
      _
    $region11: #{tpu_custom_call.1} parent=1 // pred_check_branch
      %41 = sbr.rel (0) target = $region13
    $region12: #{tpu_custom_call.1} parent=1 // pred_region
      %43 = vsyncadd [#allocation6], 0
      %s45 = sshll.u32 %s2, 4
      %s46 = int_to_ptr.hbm [resolvable:$true] %s45
      %s47 = sshll.u32 [#allocation7], 4
      %s48 = int_to_ptr.vmem [resolvable:$true] %s47
      %50 = dma.hbm_to_vmem [thread:$0]  %s46, 64, %s48, [#allocation6]
    $region13: #{tpu_custom_call.1} parent=1 // pred_fallthru
      _
    // Predicated region
    $region14: #{tpu_custom_call.1} parent=1 // pred_check
      _
    $region15: #{tpu_custom_call.1} parent=1 // pred_check_branch
      %52 = sbr.rel (0) target = $region17
    $region16: #{tpu_custom_call.1} parent=1 // pred_region
      %54 = vsyncadd [#allocation9], 0
      %s55 = sshll.u32 %s3, 4
      %s56 = int_to_ptr.hbm [resolvable:$true] %s55
      %s57 = sshll.u32 [#allocation8], 4
      %s58 = int_to_ptr.vmem [resolvable:$true] %s57
      %63 = dma.hbm_to_vmem [thread:$0]  %s56, 4096, %s58, [#allocation9], 64, 64, 4
    $region17: #{tpu_custom_call.1} parent=1 // pred_fallthru
      _
    // Predicated region
    $region18: #{tpu_custom_call.1} parent=1 // pred_check
      _
    $region19: #{tpu_custom_call.1} parent=1 // pred_check_branch
      %65 = sbr.rel (0) target = $region21
    $region20: #{tpu_custom_call.1} parent=1 // pred_region
      _
    $region21: #{tpu_custom_call.1} parent=1 // pred_fallthru
      _
    // Predicated region
    $region22: #{tpu_custom_call.1} parent=1 // pred_check
      _
    $region23: #{tpu_custom_call.1} parent=1 // pred_check_branch
      %67 = sbr.rel (0) target = $region25
    $region24: #{tpu_custom_call.1} parent=1 // pred_region
      %69 = dma.done [#allocation3], 128
    $region25: #{tpu_custom_call.1} parent=1 // pred_fallthru
      _
    // Predicated region
    $region26: #{tpu_custom_call.1} parent=1 // pred_check
      _
    $region27: #{tpu_custom_call.1} parent=1 // pred_check_branch
      %71 = sbr.rel (0) target = $region29
    $region28: #{tpu_custom_call.1} parent=1 // pred_region
      %73 = dma.done [#allocation6], 1024
    $region29: #{tpu_custom_call.1} parent=1 // pred_fallthru
      _
    // Predicated region
    $region30: #{tpu_custom_call.1} parent=1 // pred_check
      _
    $region31: #{tpu_custom_call.1} parent=1 // pred_check_branch
      %75 = sbr.rel (0) target = $region33
    $region32: #{tpu_custom_call.1} parent=1 // pred_region
      %77 = dma.done [#allocation6], 64
    $region33: #{tpu_custom_call.1} parent=1 // pred_fallthru
      _
    // Predicated region
    $region34: #{tpu_custom_call.1} parent=1 // pred_check
      _
    $region35: #{tpu_custom_call.1} parent=1 // pred_check_branch
      %79 = sbr.rel (0) target = $region37
    $region36: #{tpu_custom_call.1} parent=1 // pred_region
      %81 = dma.done [#allocation9], 4096
    $region37: #{tpu_custom_call.1} parent=1 // pred_fallthru
      _
    %v83 = vld [vmem:[#allocation2] sm:$0xff]
    %v84 = vpack.c.bf16 %v83, %v83
    %v85 = vld [vmem:[#allocation5] sm:$0xff]
    %v86 = vld [vmem:[#allocation5 + $0x8] sm:$0xff]
    %v87 = vld [vmem:[#allocation5 + $0x10] sm:$0xff]
    %v88 = vld [vmem:[#allocation5 + $0x18] sm:$0xff]
    %v89 = vld [vmem:[#allocation5 + $0x20] sm:$0xff]
    %v90 = vld [vmem:[#allocation5 + $0x28] sm:$0xff]
    %v91 = vld [vmem:[#allocation5 + $0x30] sm:$0xff]
    %v92 = vld [vmem:[#allocation5 + $0x38] sm:$0xff]
    %v93 = vld [vmem:[#allocation7] sm:$0xf]
    %v95 = vperm.slane %v93, 0
    %v96 = vperm.slane %v93, 1
    %v97 = vperm.slane %v93, 2
    %v98 = vperm.slane %v93, 3
    %v111 = vunpack.c.l.b16 %v85
    %v112 = vunpack.c.h.b16 %v85
    %v113 = vunpack.c.l.b16 %v86
    %v114 = vunpack.c.h.b16 %v86
    %v115 = vunpack.c.l.b16 %v87
    %v116 = vunpack.c.h.b16 %v87
    %v117 = vunpack.c.l.b16 %v88
    %v118 = vunpack.c.h.b16 %v88
    %v119 = vunpack.c.l.b16 %v89
    %v120 = vunpack.c.h.b16 %v89
    %v121 = vunpack.c.l.b16 %v90
    %v122 = vunpack.c.h.b16 %v90
    %v123 = vunpack.c.l.b16 %v91
    %v124 = vunpack.c.h.b16 %v91
    %v125 = vunpack.c.l.b16 %v92
    %v126 = vunpack.c.h.b16 %v92
    %v127 = vpack.c.b16 %v115, %v111
    %v128 = vpack.c.b16 %v116, %v112
    %v129 = vpack.c.b16 %v117, %v113
    %v130 = vpack.c.b16 %v118, %v114
    %v131 = vpack.c.b16 %v123, %v119
    %v132 = vpack.c.b16 %v124, %v120
    %v133 = vpack.c.b16 %v125, %v121
    %v134 = vpack.c.b16 %v126, %v122
    %vm143 = vcmask 261120
    %v145 = vsel %vm143, %v84, 0
    %147 = vmatpush.bf16.msra.mxu0 0
    %148 = vmatpush.bf16.msra.mxu0 0
    %149 = vmatpush.bf16.msra.mxu0 0
    %150 = vmatpush.bf16.msra.mxu0 0
    %151 = vmatpush.bf16.msra.mxu0 0
    %152 = vmatpush.bf16.msra.mxu0 0
    %153 = vmatpush.bf16.msra.mxu0 %v131
    %154 = vmatpush.bf16.msra.mxu0 %v127
    %155 = vmatmul.bf16.gmra.mxu0 %v145
    %v156 = vpop.f32.mrf.mxu0
    %v157 = vadd.f32 %v95, %v156
    %v158 = vpop.f32.mrf.mxu0
    %159 = vdwg.mxu0
    %160 = vmatpush.bf16.msra.mxu0 0
    %161 = vmatpush.bf16.msra.mxu0 0
    %162 = vmatpush.bf16.msra.mxu0 0
    %163 = vmatpush.bf16.msra.mxu0 0
    %164 = vmatpush.bf16.msra.mxu0 0
    %165 = vmatpush.bf16.msra.mxu0 0
    %166 = vmatpush.bf16.msra.mxu0 %v132
    %167 = vmatpush.bf16.msra.mxu0 %v128
    %168 = vmatmul.bf16.gmra.mxu0 %v145
    %v169 = vpop.f32.mrf.mxu0
    %v170 = vadd.f32 %v96, %v169
    %v171 = vpop.f32.mrf.mxu0
    %172 = vdwg.mxu0
    %173 = vmatpush.bf16.msra.mxu0 0
    %174 = vmatpush.bf16.msra.mxu0 0
    %175 = vmatpush.bf16.msra.mxu0 0
    %176 = vmatpush.bf16.msra.mxu0 0
    %177 = vmatpush.bf16.msra.mxu0 0
    %178 = vmatpush.bf16.msra.mxu0 0
    %179 = vmatpush.bf16.msra.mxu0 %v133
    %180 = vmatpush.bf16.msra.mxu0 %v129
    %181 = vmatmul.bf16.gmra.mxu0 %v145
    %v182 = vpop.f32.mrf.mxu0
    %v183 = vadd.f32 %v97, %v182
    %v184 = vpop.f32.mrf.mxu0
    %185 = vdwg.mxu0
    %186 = vmatpush.bf16.msra.mxu0 0
    %187 = vmatpush.bf16.msra.mxu0 0
    %188 = vmatpush.bf16.msra.mxu0 0
    %189 = vmatpush.bf16.msra.mxu0 0
    %190 = vmatpush.bf16.msra.mxu0 0
    %191 = vmatpush.bf16.msra.mxu0 0
    %192 = vmatpush.bf16.msra.mxu0 %v134
    %193 = vmatpush.bf16.msra.mxu0 %v130
    %194 = vmatmul.bf16.gmra.mxu0 %v145
    %v195 = vpop.f32.mrf.mxu0
    %v196 = vadd.f32 %v98, %v195
    %v197 = vpop.f32.mrf.mxu0
    %198 = vdwg.mxu0
    %v199 = vmax.f32 %v157, 0.0
    %v200 = vmax.f32 %v170, 0.0
    %v201 = vmax.f32 %v183, 0.0
    %v202 = vmax.f32 %v196, 0.0
    %v203 = vpack.c.bf16 %v199, %v199
    %v204 = vpack.c.bf16 %v200, %v200
    %v205 = vpack.c.bf16 %v201, %v201
    %v206 = vpack.c.bf16 %v202, %v202
    %v207 = vld [vmem:[#allocation8] sm:$0xf]
    %v208 = vld [vmem:[#allocation8 + $0x4] sm:$0xf]
    %v209 = vld [vmem:[#allocation8 + $0x8] sm:$0xf]
    %v210 = vld [vmem:[#allocation8 + $0xc] sm:$0xf]
    %v211 = vld [vmem:[#allocation8 + $0x10] sm:$0xf]
    %v212 = vld [vmem:[#allocation8 + $0x14] sm:$0xf]
    %v213 = vld [vmem:[#allocation8 + $0x18] sm:$0xf]
    %v214 = vld [vmem:[#allocation8 + $0x1c] sm:$0xf]
    %v215 = vld [vmem:[#allocation8 + $0x20] sm:$0xf]
    %v216 = vld [vmem:[#allocation8 + $0x24] sm:$0xf]
    %v217 = vld [vmem:[#allocation8 + $0x28] sm:$0xf]
    %v218 = vld [vmem:[#allocation8 + $0x2c] sm:$0xf]
    %v219 = vld [vmem:[#allocation8 + $0x30] sm:$0xf]
    %v220 = vld [vmem:[#allocation8 + $0x34] sm:$0xf]
    %v221 = vld [vmem:[#allocation8 + $0x38] sm:$0xf]
    %v222 = vld [vmem:[#allocation8 + $0x3c] sm:$0xf]
    %v223 = vld [vmem:[#allocation8 + $0x40] sm:$0xf]
    %v224 = vld [vmem:[#allocation8 + $0x44] sm:$0xf]
    %v225 = vld [vmem:[#allocation8 + $0x48] sm:$0xf]
    %v226 = vld [vmem:[#allocation8 + $0x4c] sm:$0xf]
    %v227 = vld [vmem:[#allocation8 + $0x50] sm:$0xf]
    %v228 = vld [vmem:[#allocation8 + $0x54] sm:$0xf]
    %v229 = vld [vmem:[#allocation8 + $0x58] sm:$0xf]
    %v230 = vld [vmem:[#allocation8 + $0x5c] sm:$0xf]
    %v231 = vld [vmem:[#allocation8 + $0x60] sm:$0xf]
    %v232 = vld [vmem:[#allocation8 + $0x64] sm:$0xf]
    %v233 = vld [vmem:[#allocation8 + $0x68] sm:$0xf]
    %v234 = vld [vmem:[#allocation8 + $0x6c] sm:$0xf]
    %v235 = vld [vmem:[#allocation8 + $0x70] sm:$0xf]
    %v236 = vld [vmem:[#allocation8 + $0x74] sm:$0xf]
    %v237 = vld [vmem:[#allocation8 + $0x78] sm:$0xf]
    %v238 = vld [vmem:[#allocation8 + $0x7c] sm:$0xf]
    %v239 = vld [vmem:[#allocation8 + $0x80] sm:$0xf]
    %v240 = vld [vmem:[#allocation8 + $0x84] sm:$0xf]
    %v241 = vld [vmem:[#allocation8 + $0x88] sm:$0xf]
    %v242 = vld [vmem:[#allocation8 + $0x8c] sm:$0xf]
    %v243 = vld [vmem:[#allocation8 + $0x90] sm:$0xf]
    %v244 = vld [vmem:[#allocation8 + $0x94] sm:$0xf]
    %v245 = vld [vmem:[#allocation8 + $0x98] sm:$0xf]
    %v246 = vld [vmem:[#allocation8 + $0x9c] sm:$0xf]
    %v247 = vld [vmem:[#allocation8 + $0xa0] sm:$0xf]
    %v248 = vld [vmem:[#allocation8 + $0xa4] sm:$0xf]
    %v249 = vld [vmem:[#allocation8 + $0xa8] sm:$0xf]
    %v250 = vld [vmem:[#allocation8 + $0xac] sm:$0xf]
    %v251 = vld [vmem:[#allocation8 + $0xb0] sm:$0xf]
    %v252 = vld [vmem:[#allocation8 + $0xb4] sm:$0xf]
    %v253 = vld [vmem:[#allocation8 + $0xb8] sm:$0xf]
    %v254 = vld [vmem:[#allocation8 + $0xbc] sm:$0xf]
    %v255 = vld [vmem:[#allocation8 + $0xc0] sm:$0xf]
    %v256 = vld [vmem:[#allocation8 + $0xc4] sm:$0xf]
    %v257 = vld [vmem:[#allocation8 + $0xc8] sm:$0xf]
    %v258 = vld [vmem:[#allocation8 + $0xcc] sm:$0xf]
    %v259 = vld [vmem:[#allocation8 + $0xd0] sm:$0xf]
    %v260 = vld [vmem:[#allocation8 + $0xd4] sm:$0xf]
    %v261 = vld [vmem:[#allocation8 + $0xd8] sm:$0xf]
    %v262 = vld [vmem:[#allocation8 + $0xdc] sm:$0xf]
    %v263 = vld [vmem:[#allocation8 + $0xe0] sm:$0xf]
    %v264 = vld [vmem:[#allocation8 + $0xe4] sm:$0xf]
    %v265 = vld [vmem:[#allocation8 + $0xe8] sm:$0xf]
    %v266 = vld [vmem:[#allocation8 + $0xec] sm:$0xf]
    %v267 = vld [vmem:[#allocation8 + $0xf0] sm:$0xf]
    %v268 = vld [vmem:[#allocation8 + $0xf4] sm:$0xf]
    %v269 = vld [vmem:[#allocation8 + $0xf8] sm:$0xf]
    %v270 = vld [vmem:[#allocation8 + $0xfc] sm:$0xf]
    %v271 = vld [vmem:[%s4] sm:$0x1]
    %v273 = vperm.slane %v271, 0
    %v339 = vunpack.c.l.b16 %v207
    %v340 = vunpack.c.l.b16 %v208
    %v341 = vunpack.c.l.b16 %v209
    %v342 = vunpack.c.l.b16 %v210
    %v343 = vunpack.c.l.b16 %v211
    %v344 = vunpack.c.l.b16 %v212
    %v345 = vunpack.c.l.b16 %v213
    %v346 = vunpack.c.l.b16 %v214
    %v347 = vunpack.c.l.b16 %v215
    %v348 = vunpack.c.l.b16 %v216
    %v349 = vunpack.c.l.b16 %v217
    %v350 = vunpack.c.l.b16 %v218
    %v351 = vunpack.c.l.b16 %v219
    %v352 = vunpack.c.l.b16 %v220
    %v353 = vunpack.c.l.b16 %v221
    %v354 = vunpack.c.l.b16 %v222
    %v355 = vunpack.c.l.b16 %v223
    %v356 = vunpack.c.l.b16 %v224
    %v357 = vunpack.c.l.b16 %v225
    %v358 = vunpack.c.l.b16 %v226
    %v359 = vunpack.c.l.b16 %v227
    %v360 = vunpack.c.l.b16 %v228
    %v361 = vunpack.c.l.b16 %v229
    %v362 = vunpack.c.l.b16 %v230
    %v363 = vunpack.c.l.b16 %v231
    %v364 = vunpack.c.l.b16 %v232
    %v365 = vunpack.c.l.b16 %v233
    %v366 = vunpack.c.l.b16 %v234
    %v367 = vunpack.c.l.b16 %v235
    %v368 = vunpack.c.l.b16 %v236
    %v369 = vunpack.c.l.b16 %v237
    %v370 = vunpack.c.l.b16 %v238
    %v371 = vunpack.c.l.b16 %v239
    %v372 = vunpack.c.l.b16 %v240
    %v373 = vunpack.c.l.b16 %v241
    %v374 = vunpack.c.l.b16 %v242
    %v375 = vunpack.c.l.b16 %v243
    %v376 = vunpack.c.l.b16 %v244
    %v377 = vunpack.c.l.b16 %v245
    %v378 = vunpack.c.l.b16 %v246
    %v379 = vunpack.c.l.b16 %v247
    %v380 = vunpack.c.l.b16 %v248
    %v381 = vunpack.c.l.b16 %v249
    %v382 = vunpack.c.l.b16 %v250
    %v383 = vunpack.c.l.b16 %v251
    %v384 = vunpack.c.l.b16 %v252
    %v385 = vunpack.c.l.b16 %v253
    %v386 = vunpack.c.l.b16 %v254
    %v387 = vunpack.c.l.b16 %v255
    %v388 = vunpack.c.l.b16 %v256
    %v389 = vunpack.c.l.b16 %v257
    %v390 = vunpack.c.l.b16 %v258
    %v391 = vunpack.c.l.b16 %v259
    %v392 = vunpack.c.l.b16 %v260
    %v393 = vunpack.c.l.b16 %v261
    %v394 = vunpack.c.l.b16 %v262
    %v395 = vunpack.c.l.b16 %v263
    %v396 = vunpack.c.l.b16 %v264
    %v397 = vunpack.c.l.b16 %v265
    %v398 = vunpack.c.l.b16 %v266
    %v399 = vunpack.c.l.b16 %v267
    %v400 = vunpack.c.l.b16 %v268
    %v401 = vunpack.c.l.b16 %v269
    %v402 = vunpack.c.l.b16 %v270
    %v403 = vpack.c.b16 %v340, %v339
    %v404 = vpack.c.b16 %v342, %v341
    %v405 = vpack.c.b16 %v344, %v343
    %v406 = vpack.c.b16 %v346, %v345
    %v407 = vpack.c.b16 %v348, %v347
    %v408 = vpack.c.b16 %v350, %v349
    %v409 = vpack.c.b16 %v352, %v351
    %v410 = vpack.c.b16 %v354, %v353
    %v411 = vpack.c.b16 %v356, %v355
    %v412 = vpack.c.b16 %v358, %v357
    %v413 = vpack.c.b16 %v360, %v359
    %v414 = vpack.c.b16 %v362, %v361
    %v415 = vpack.c.b16 %v364, %v363
    %v416 = vpack.c.b16 %v366, %v365
    %v417 = vpack.c.b16 %v368, %v367
    %v418 = vpack.c.b16 %v370, %v369
    %v419 = vpack.c.b16 %v372, %v371
    %v420 = vpack.c.b16 %v374, %v373
    %v421 = vpack.c.b16 %v376, %v375
    %v422 = vpack.c.b16 %v378, %v377
    %v423 = vpack.c.b16 %v380, %v379
    %v424 = vpack.c.b16 %v382, %v381
    %v425 = vpack.c.b16 %v384, %v383
    %v426 = vpack.c.b16 %v386, %v385
    %v427 = vpack.c.b16 %v388, %v387
    %v428 = vpack.c.b16 %v390, %v389
    %v429 = vpack.c.b16 %v392, %v391
    %v430 = vpack.c.b16 %v394, %v393
    %v431 = vpack.c.b16 %v396, %v395
    %v432 = vpack.c.b16 %v398, %v397
    %v433 = vpack.c.b16 %v400, %v399
    %v434 = vpack.c.b16 %v402, %v401
    %467 = vmatpush.bf16.msra.mxu0 %v410
    %468 = vmatpush.bf16.msra.mxu0 %v409
    %469 = vmatpush.bf16.msra.mxu0 %v408
    %470 = vmatpush.bf16.msra.mxu0 %v407
    %471 = vmatpush.bf16.msra.mxu0 %v406
    %472 = vmatpush.bf16.msra.mxu0 %v405
    %473 = vmatpush.bf16.msra.mxu0 %v404
    %474 = vmatpush.bf16.msra.mxu0 %v403
    %475 = vmatmul.bf16.gmra.mxu0 %v203
    %v476 = vpop.f32.mrf.mxu0
    %v477 = vadd.f32 %v273, %v476
    %v478 = vpop.f32.mrf.mxu0
    %479 = vdwg.mxu0
    %480 = vmatpush.bf16.msra.mxu0 %v418
    %481 = vmatpush.bf16.msra.mxu0 %v417
    %482 = vmatpush.bf16.msra.mxu0 %v416
    %483 = vmatpush.bf16.msra.mxu0 %v415
    %484 = vmatpush.bf16.msra.mxu0 %v414
    %485 = vmatpush.bf16.msra.mxu0 %v413
    %486 = vmatpush.bf16.msra.mxu0 %v412
    %487 = vmatpush.bf16.msra.mxu0 %v411
    %488 = vmatmul.bf16.gmra.mxu0 %v204
    %v489 = vpop.f32.mrf.mxu0
    %v490 = vadd.f32 %v477, %v489
    %v491 = vpop.f32.mrf.mxu0
    %492 = vdwg.mxu0
    %493 = vmatpush.bf16.msra.mxu0 %v426
    %494 = vmatpush.bf16.msra.mxu0 %v425
    %495 = vmatpush.bf16.msra.mxu0 %v424
    %496 = vmatpush.bf16.msra.mxu0 %v423
    %497 = vmatpush.bf16.msra.mxu0 %v422
    %498 = vmatpush.bf16.msra.mxu0 %v421
    %499 = vmatpush.bf16.msra.mxu0 %v420
    %500 = vmatpush.bf16.msra.mxu0 %v419
    %501 = vmatmul.bf16.gmra.mxu0 %v205
    %v502 = vpop.f32.mrf.mxu0
    %v503 = vadd.f32 %v490, %v502
    %v504 = vpop.f32.mrf.mxu0
    %505 = vdwg.mxu0
    %506 = vmatpush.bf16.msra.mxu0 %v434
    %507 = vmatpush.bf16.msra.mxu0 %v433
    %508 = vmatpush.bf16.msra.mxu0 %v432
    %509 = vmatpush.bf16.msra.mxu0 %v431
    %510 = vmatpush.bf16.msra.mxu0 %v430
    %511 = vmatpush.bf16.msra.mxu0 %v429
    %512 = vmatpush.bf16.msra.mxu0 %v428
    %513 = vmatpush.bf16.msra.mxu0 %v427
    %514 = vmatmul.bf16.gmra.mxu0 %v206
    %v515 = vpop.f32.mrf.mxu0
    %v516 = vadd.f32 %v503, %v515
    %v517 = vpop.f32.mrf.mxu0
    %518 = vdwg.mxu0
    %v519 = vpack.c.bf16 %v516, %v516
    %v521 = vrot.slane %v519, 3
    %vm522 = vcmask 1040384
    %v525 = vsel %vm522, %v519, %v521
    %vm526 = vcmask 1041409
    %v527 = vsel %vm526, %v519, %v521
    %v529 = vrot.slane %v527, 1
    %vm530 = vcmask 1042434
    %v531 = vsel %vm530, %v519, %v521
    %v533 = vrot.slane %v531, 2
    %vm534 = vcmask 1043459
    %v535 = vsel %vm534, %v519, %v521
    %v537 = vrot.slane %v535, 3
    %542 = vst [vmem:[#allocation10] sm:$0x1] %v525
    %543 = vst [vmem:[#allocation10 + $0x1] sm:$0x1] %v529
    %544 = vst [vmem:[#allocation10 + $0x2] sm:$0x1] %v533
    %545 = vst [vmem:[#allocation10 + $0x3] sm:$0x1] %v537
    // Predicated region
    $region38: #{tpu_custom_call.1} parent=1 // pred_check
      _
    $region39: #{tpu_custom_call.1} parent=1 // pred_check_branch
      %547 = sbr.rel (0) target = $region41
    $region40: #{tpu_custom_call.1} parent=1 // pred_region
      %549 = vsyncadd [#allocation4], 48
      %s550 = sshll.u32 [#allocation10], 4
      %s551 = int_to_ptr.vmem [resolvable:$true] %s550
      %s552 = sshll.u32 %s5, 4
      %s553 = int_to_ptr.hbm [resolvable:$true] %s552
      %558 = dma.vmem_to_hbm [thread:$0]  %s551, 16, %s553, [#allocation4], 16, 16, 1
    $region41: #{tpu_custom_call.1} parent=1 // pred_fallthru
      _
    // Predicated region
    $region42: #{tpu_custom_call.1} parent=1 // pred_check
      _
    $region43: #{tpu_custom_call.1} parent=1 // pred_check_branch
      %560 = sbr.rel (0) target = $region45
    $region44: #{tpu_custom_call.1} parent=1 // pred_region
      %562 = dma.done [#allocation4], 64
    $region45: #{tpu_custom_call.1} parent=1 // pred_fallthru
      _
    %563 = vsyncpa [#allocation3], 1
    %564 = vsyncpa [#allocation6], 1
    %565 = vsyncpa [#allocation9], 1
    %566 = vsyncpa [#allocation4], 1

</llo_original>
